<compile_context>
chip_gen: v5e
topology: v5e:2x2
jax: 0.10.0
libtpu: 0.0.40
codegen_flags: <defaults>
</compile_context>

<pallas_src>
import functools

import jax
import jax.numpy as jnp
from jax.experimental import pallas as pl
from jax.experimental.pallas import tpu as pltpu


def _round_up(x, m):
    return ((x + m - 1) // m) * m


def _pick_tile(n_pad, cap):
    """Largest multiple of 128 that divides n_pad and is <= cap."""
    units = n_pad // 128
    cap_units = max(1, cap // 128)
    best = 1
    for d in range(1, min(units, cap_units) + 1):
        if units % d == 0:
            best = d
    return best * 128


# ------------------------------ Pallas kernels -------------------------------

def xw_kernel(x_ref, w_ref, dinv_ref, h_ref):
    """H = dinv * (X @ W): f32 MXU accumulation, f32 row scale, bf16 store."""
    xw = jnp.dot(x_ref[...], w_ref[...], preferred_element_type=jnp.float32)
    h_ref[...] = (dinv_ref[...] * xw).astype(h_ref.dtype)


def agg_kernel(a_ref, h_ref, dinv_ref, b_ref, o_ref, acc_ref, *, tk,
               h_resident):
    """out[i] = relu( dinv[i] * sum_k (A+I)[i,k] @ H[k] + b )."""
    k = pl.program_id(1)

    @pl.when(k == 0)
    def _():
        acc_ref[...] = jnp.zeros_like(acc_ref)

    if h_resident:
        # H is VMEM-resident (constant block index) -> slice the k-th chunk.
        start = pl.multiple_of(k * tk, tk)
        h_tile = h_ref[pl.ds(start, tk), :]
    else:
        h_tile = h_ref[...]

    acc_ref[...] += jnp.dot(a_ref[...], h_tile,
                            preferred_element_type=jnp.float32)

    @pl.when(k == pl.num_programs(1) - 1)
    def _():
        # dinv scale + bias + ReLU epilogue in f32; cast only at the store.
        o_ref[...] = jnp.maximum(
            dinv_ref[...] * acc_ref[...] + b_ref[...], 0.0
        ).astype(o_ref.dtype)


# ------------------------------ Kernel wrapper --------------------------------

def gcn_forward(a_p, dinv_p, x, w, b, *, tm_cap=1024, tk_cap=512,
                compute_dtype=jnp.bfloat16, resident_h_bytes=16 << 20):
    """relu( dinv * ((A+I) @ (dinv * (x @ w))) + b ) via tiled Pallas calls.

    a_p:    (n_pad, n_pad) unnormalized A+I in compute_dtype (padded w/ zeros)
    dinv_p: (n_pad, 1)     f32 D^{-1/2} (zeros on padded rows)
    """
    n, f_in = x.shape
    h_dim = w.shape[1]
    n_pad = a_p.shape[0]

    hp = _round_up(h_dim, 128)                      # lane-dense output width
    tk = _pick_tile(n_pad, tk_cap)                  # reduction tile (A columns)
    # Row tile: big to amortize H traffic / grid overhead, but keep >= 2 row
    # steps when possible so both v7x TensorCores get work.
    cap = tm_cap if n_pad < 256 else min(tm_cap, n_pad // 2)
    tm = _pick_tile(n_pad, cap)
    n_row = n_pad // tm
    n_red = n_pad // tk

    # Pad + cast the small operands (zero padding is exact for real rows/cols).
    x_p = jnp.zeros((n_pad, f_in), compute_dtype).at[:n, :].set(
        x.astype(compute_dtype))
    w_p = jnp.zeros((f_in, hp), compute_dtype).at[:, :h_dim].set(
        w.astype(compute_dtype))
    b_p = jnp.zeros((1, hp), jnp.float32).at[0, :h_dim].set(
        b.astype(jnp.float32))

    # ---- Stage 1: H = dinv * (X @ W), hoisted out of the aggregation loop ----
    h = pl.pallas_call(
        xw_kernel,
        out_shape=jax.ShapeDtypeStruct((n_pad, hp), compute_dtype),
        grid=(n_row,),
        in_specs=[
            pl.BlockSpec((tm, f_in), lambda i: (i, 0)),
            pl.BlockSpec((f_in, hp), lambda i: (0, 0)),
            pl.BlockSpec((tm, 1), lambda i: (i, 0)),
        ],
        out_specs=pl.BlockSpec((tm, hp), lambda i: (i, 0)),
        compiler_params=pltpu.CompilerParams(
            dimension_semantics=("parallel",)),
    )(x_p, w_p, dinv_p)

    # ---- Stage 2: out = relu(dinv * (A+I) @ H + b), tiled + pipelined ----
    h_bytes = n_pad * hp * jnp.dtype(compute_dtype).itemsize
    h_resident = h_bytes <= resident_h_bytes
    if h_resident:
        # Constant block index across the grid -> DMA'd into VMEM once.
        h_spec = pl.BlockSpec((n_pad, hp), lambda i, k: (0, 0))
    else:
        h_spec = pl.BlockSpec((tk, hp), lambda i, k: (k, 0))

    out = pl.pallas_call(
        functools.partial(agg_kernel, tk=tk, h_resident=h_resident),
        out_shape=jax.ShapeDtypeStruct((n_pad, hp), jnp.float32),
        grid=(n_row, n_red),  # (row tiles: parallel, reduction tiles: last)
        in_specs=[
            pl.BlockSpec((tm, tk), lambda i, k: (i, k)),   # A+I tile (bf16)
            h_spec,                                        # H (resident/tiled)
            pl.BlockSpec((tm, 1), lambda i, k: (i, 0)),    # dinv rows (f32)
            pl.BlockSpec((1, hp), lambda i, k: (0, 0)),    # bias (f32)
        ],
        out_specs=pl.BlockSpec((tm, hp), lambda i, k: (i, 0)),  # resident on k
        scratch_shapes=[pltpu.VMEM((tm, hp), jnp.float32)],
        compiler_params=pltpu.CompilerParams(
            dimension_semantics=("parallel", "arbitrary"),
            vmem_limit_bytes=48 * 1024 * 1024),
    )(a_p, h, dinv_p, b_p)

    return out[:n, :h_dim]


# ------------------------------ Glue (plain JAX) ------------------------------

def build_adjacency_and_dinv(edge_index, num_nodes, n_pad, dtype=jnp.bfloat16):
    """Unnormalized A+I at padded shape (direct bf16, no f32 N^2 pass) + dinv.

    Matches PyG gcn_norm: unit edge weights scatter-ADDed (duplicates count),
    explicit self-loops replaced by weight-1 self-loops, degree at destination.
    Integer edge counts are exact in bf16.
    """
    src, dst = edge_index[0], edge_index[1]
    not_loop = (src != dst)
    a = jnp.zeros((n_pad, n_pad), dtype)
    # aggregation matrix: A[dst, src] += 1 (message flows src -> dst)
    a = a.at[dst, src].add(not_loop.astype(dtype))
    idx = jnp.arange(num_nodes)
    a = a.at[idx, idx].add(jnp.ones((num_nodes,), dtype))   # self-loops
    # degree of real nodes (row sums of A+I), without touching the dense array
    deg = (jnp.zeros((num_nodes,), jnp.float32)
           .at[dst].add(not_loop.astype(jnp.float32)) + 1.0)
    dinv = jax.lax.rsqrt(deg)                                # deg >= 1 always
    dinv_p = jnp.zeros((n_pad, 1), jnp.float32).at[:num_nodes, 0].set(dinv)
    return a, dinv_p


@functools.partial(jax.jit, static_argnames=("tm_cap", "tk_cap"))
def simple_gcn_apply(x, edge_index, w, b, *, tm_cap=1024, tk_cap=512):
    n = x.shape[0]
    n_pad = _round_up(n, 128)
    a_p, dinv_p = build_adjacency_and_dinv(edge_index, n, n_pad)
    return gcn_forward(a_p, dinv_p, x, w, b, tm_cap=tm_cap, tk_cap=tk_cap)


class SimpleGCNPallas:
    """Mirrors: h = relu(GCNConv(in_dim, hidden_dim)(x, edge_index))."""

    def __init__(self, in_dim, hidden_dim, key):
        kw, kb = jax.random.split(key)
        limit = jnp.sqrt(6.0 / (in_dim + hidden_dim))  # Glorot-uniform (PyG)
        self.w = jax.random.uniform(kw, (in_dim, hidden_dim),
                                    jnp.float32, -limit, limit)
        self.b = jax.random.uniform(kb, (hidden_dim,),
                                    jnp.float32, -0.1, 0.1)

    def __call__(self, x, edge_index):
        return simple_gcn_apply(x, edge_index, self.w, self.b)


# ----------------------------------- Main -------------------------------------

if __name__ == "__main__":
    key = jax.random.PRNGKey(0)
    k_x, k_e, k_p = jax.random.split(key, 3)

    num_nodes = 16
    in_dim = 8
    hidden_dim = 32
    num_edges = 40

    # Node features [N, in_dim] and deterministic random edge_index [2, E].
    x = jax.random.normal(k_x, (num_nodes, in_dim), dtype=jnp.float32)
    edge_index = jax.random.randint(k_e, (2, num_edges), 0, num_nodes,
                                    dtype=jnp.int32)

    model = SimpleGCNPallas(in_dim, hidden_dim, k_p)
    out = model(x, edge_index)
    out = jax.block_until_ready(out)
    assert out.shape == (num_nodes, hidden_dim)

    # References.
    f32, cd = jnp.float32, jnp.bfloat16
    src, dst = edge_index[0], edge_index[1]
    not_loop = (src != dst).astype(f32)
    a_f32 = jnp.zeros((num_nodes, num_nodes), f32).at[dst, src].add(not_loop)
    a_f32 = a_f32 + jnp.eye(num_nodes, dtype=f32)
    deg = a_f32.sum(axis=1)
    dinv = 1.0 / jnp.sqrt(deg)

    # (a) emulate exactly what the kernel computes (bf16 operands, f32 accum)
    xw = x.astype(cd).astype(f32) @ model.w.astype(cd).astype(f32)
    h_s = (dinv[:, None] * xw).astype(cd).astype(f32)
    ref_emu = jnp.maximum(dinv[:, None] * (a_f32 @ h_s) + model.b, 0.0)
    # (b) pure-f32 PyTorch-semantics reference (loose bf16 tolerance)
    a_hat = dinv[:, None] * a_f32 * dinv[None, :]
    ref_f32 = jnp.maximum(a_hat @ (x @ model.w) + model.b, 0.0)

    assert jnp.allclose(out, ref_emu, atol=2e-2, rtol=2e-2), \
        float(jnp.max(jnp.abs(out - ref_emu)))
    assert jnp.allclose(out, ref_f32, atol=7e-2, rtol=7e-2), \
        float(jnp.max(jnp.abs(out - ref_f32)))

    print("KERNEL_OK")
</pallas_src>

<mosaic_0001>
module attributes {stable_mosaic.version = 11 : i64} {
  func.func @xw_kernel(%arg0: i32, %arg1: memref<128x8xbf16, #tpu.memory_space<vmem>>, %arg2: memref<8x128xbf16, #tpu.memory_space<vmem>>, %arg3: memref<128x1xf32, #tpu.memory_space<vmem>>, %arg4: memref<128x128xbf16, #tpu.memory_space<vmem>>) attributes {dimension_semantics = [#tpu.dimension_semantics<parallel>], iteration_bounds = array<i64: 1>, scalar_prefetch = 0 : i64, scratch_operands = 0 : i64, tpu.core_type = #tpu.core_type<tc>, window_params = [{transform_indices = @transform_0, window_bounds = array<i64: 128, 8>}, {pipeline_mode = #tpu.pipeline_mode<synchronous>, transform_indices = @transform_1, window_bounds = array<i64: 8, 128>}, {transform_indices = @transform_2, window_bounds = array<i64: 128, 1>}, {transform_indices = @transform_3, window_bounds = array<i64: 128, 128>}]} {
    %c0 = arith.constant 0 : index
    %c0_0 = arith.constant 0 : index
    %0 = vector.load %arg1[%c0, %c0_0] : memref<128x8xbf16, #tpu.memory_space<vmem>>, vector<128x8xbf16>
    %c0_1 = arith.constant 0 : index
    %c0_2 = arith.constant 0 : index
    %1 = vector.load %arg2[%c0_1, %c0_2] : memref<8x128xbf16, #tpu.memory_space<vmem>>, vector<8x128xbf16>
    %cst = arith.constant dense<0.000000e+00> : vector<128x128xf32>
    %2 = tpu.matmul %0, %1, %cst {dimension_numbers = #tpu.dot_dimension_numbers<[1], [0], [0], [1], [0, 0, 1, 1], [], []>} : vector<128x8xbf16>, vector<8x128xbf16>, vector<128x128xf32> -> vector<128x128xf32>
    %c0_3 = arith.constant 0 : index
    %c0_4 = arith.constant 0 : index
    %3 = vector.load %arg3[%c0_3, %c0_4] : memref<128x1xf32, #tpu.memory_space<vmem>>, vector<128x1xf32>
    %4 = vector.broadcast %3 : vector<128x1xf32> to vector<128x128xf32>
    %5 = arith.mulf %4, %2 : vector<128x128xf32>
    %6 = arith.truncf %5 : vector<128x128xf32> to vector<128x128xbf16>
    %c0_5 = arith.constant 0 : index
    %c0_6 = arith.constant 0 : index
    %7 = vector.load %arg4[%c0_5, %c0_6] : memref<128x128xbf16, #tpu.memory_space<vmem>>, vector<128x128xbf16>
    tpu.vector_store %arg4[%c0_5, %c0_6], %6 {strides = array<i32>} : memref<128x128xbf16, #tpu.memory_space<vmem>>, vector<128x128xbf16>,
    return
  }
  func.func @transform_0(%arg0: i32) -> (i32, i32) {
    %c0_i32 = arith.constant 0 : i32
    %c0_i32_0 = arith.constant 0 : i32
    return %arg0, %c0_i32 : i32, i32
  }
  func.func @transform_1(%arg0: i32) -> (i32, i32) {
    %c0_i32 = arith.constant 0 : i32
    %c0_i32_0 = arith.constant 0 : i32
    %c0_i32_1 = arith.constant 0 : i32
    return %c0_i32, %c0_i32_0 : i32, i32
  }
  func.func @transform_2(%arg0: i32) -> (i32, i32) {
    %c0_i32 = arith.constant 0 : i32
    %c0_i32_0 = arith.constant 0 : i32
    return %arg0, %c0_i32 : i32, i32
  }
  func.func @transform_3(%arg0: i32) -> (i32, i32) {
    %c0_i32 = arith.constant 0 : i32
    %c0_i32_0 = arith.constant 0 : i32
    return %arg0, %c0_i32 : i32, i32
  }
}

module attributes {stable_mosaic.version = 11 : i64} {
  func.func @agg_kernel(%arg0: i32, %arg1: i32, %arg2: memref<128x128xbf16, #tpu.memory_space<vmem>>, %arg3: memref<128x128xbf16, #tpu.memory_space<vmem>>, %arg4: memref<128x1xf32, #tpu.memory_space<vmem>>, %arg5: memref<1x128xf32, #tpu.memory_space<vmem>>, %arg6: memref<128x128xf32, #tpu.memory_space<vmem>>, %arg7: memref<128x128xf32, #tpu.memory_space<vmem>>) attributes {dimension_semantics = [#tpu.dimension_semantics<parallel>, #tpu.dimension_semantics<arbitrary>], iteration_bounds = array<i64: 1, 1>, scalar_prefetch = 0 : i64, scratch_operands = 1 : i64, tpu.core_type = #tpu.core_type<tc>, window_params = [{transform_indices = @transform_0, window_bounds = array<i64: 128, 128>}, {pipeline_mode = #tpu.pipeline_mode<synchronous>, transform_indices = @transform_1, window_bounds = array<i64: 128, 128>}, {transform_indices = @transform_2, window_bounds = array<i64: 128, 1>}, {pipeline_mode = #tpu.pipeline_mode<synchronous>, transform_indices = @transform_3, window_bounds = array<i64: 1, 128>}, {transform_indices = @transform_4, window_bounds = array<i64: 128, 128>}]} {
    %c0_i32 = arith.constant 0 : i32
    %0 = arith.cmpi eq, %arg1, %c0_i32 : i32
    %1 = arith.extui %0 : i1 to i32
    %c0_i32_0 = arith.constant 0 : i32
    %2 = arith.cmpi ne, %1, %c0_i32_0 : i32
    scf.if %2 {
      %cst_9 = arith.constant 0.000000e+00 : f32
      %15 = vector.broadcast %cst_9 : f32 to vector<128x128xf32>
      %c0_10 = arith.constant 0 : index
      %c0_11 = arith.constant 0 : index
      %16 = vector.load %arg7[%c0_10, %c0_11] : memref<128x128xf32, #tpu.memory_space<vmem>>, vector<128x128xf32>
      tpu.vector_store %arg7[%c0_10, %c0_11], %15 {strides = array<i32>} : memref<128x128xf32, #tpu.memory_space<vmem>>, vector<128x128xf32>,
    } else {
    }
    %c128_i32 = arith.constant 128 : i32
    %3 = arith.muli %arg1, %c128_i32 : i32
    %4 = tpu.assume_multiple %3, 128 : i32
    %5 = arith.index_cast %4 : i32 to index
    %c0 = arith.constant 0 : index
    %6 = vector.load %arg3[%5, %c0] : memref<128x128xbf16, #tpu.memory_space<vmem>>, vector<128x128xbf16>
    %c0_1 = arith.constant 0 : index
    %c0_2 = arith.constant 0 : index
    %7 = vector.load %arg7[%c0_1, %c0_2] : memref<128x128xf32, #tpu.memory_space<vmem>>, vector<128x128xf32>
    %c0_3 = arith.constant 0 : index
    %c0_4 = arith.constant 0 : index
    %8 = vector.load %arg2[%c0_3, %c0_4] : memref<128x128xbf16, #tpu.memory_space<vmem>>, vector<128x128xbf16>
    %cst = arith.constant dense<0.000000e+00> : vector<128x128xf32>
    %9 = tpu.matmul %8, %6, %cst {dimension_numbers = #tpu.dot_dimension_numbers<[1], [0], [0], [1], [0, 0, 1, 1], [], []>} : vector<128x128xbf16>, vector<128x128xbf16>, vector<128x128xf32> -> vector<128x128xf32>
    %10 = arith.addf %7, %9 : vector<128x128xf32>
    %c0_5 = arith.constant 0 : index
    %c0_6 = arith.constant 0 : index
    %11 = vector.load %arg7[%c0_5, %c0_6] : memref<128x128xf32, #tpu.memory_space<vmem>>, vector<128x128xf32>
    tpu.vector_store %arg7[%c0_5, %c0_6], %10 {strides = array<i32>} : memref<128x128xf32, #tpu.memory_space<vmem>>, vector<128x128xf32>,
    %c0_i32_7 = arith.constant 0 : i32
    %12 = arith.cmpi eq, %arg1, %c0_i32_7 : i32
    %13 = arith.extui %12 : i1 to i32
    %c0_i32_8 = arith.constant 0 : i32
    %14 = arith.cmpi ne, %13, %c0_i32_8 : i32
    scf.if %14 {
      %c0_9 = arith.constant 0 : index
      %c0_10 = arith.constant 0 : index
      %15 = vector.load %arg4[%c0_9, %c0_10] : memref<128x1xf32, #tpu.memory_space<vmem>>, vector<128x1xf32>
      %c0_11 = arith.constant 0 : index
      %c0_12 = arith.constant 0 : index
      %16 = vector.load %arg7[%c0_11, %c0_12] : memref<128x128xf32, #tpu.memory_space<vmem>>, vector<128x128xf32>
      %17 = vector.broadcast %15 : vector<128x1xf32> to vector<128x128xf32>
      %18 = arith.mulf %17, %16 : vector<128x128xf32>
      %c0_13 = arith.constant 0 : index
      %c0_14 = arith.constant 0 : index
      %19 = vector.load %arg5[%c0_13, %c0_14] : memref<1x128xf32, #tpu.memory_space<vmem>>, vector<1x128xf32>
      %20 = vector.broadcast %19 : vector<1x128xf32> to vector<128x128xf32>
      %21 = arith.addf %18, %20 : vector<128x128xf32>
      %cst_15 = arith.constant 0.000000e+00 : f32
      %22 = vector.broadcast %cst_15 : f32 to vector<128x128xf32>
      %23 = arith.maximumf %21, %22 : vector<128x128xf32>
      %c0_16 = arith.constant 0 : index
      %c0_17 = arith.constant 0 : index
      %24 = vector.load %arg6[%c0_16, %c0_17] : memref<128x128xf32, #tpu.memory_space<vmem>>, vector<128x128xf32>
      tpu.vector_store %arg6[%c0_16, %c0_17], %23 {strides = array<i32>} : memref<128x128xf32, #tpu.memory_space<vmem>>, vector<128x128xf32>,
    } else {
    }
    return
  }
  func.func @transform_0(%arg0: i32, %arg1: i32) -> (i32, i32) {
    %c0_i32 = arith.constant 0 : i32
    return %arg0, %arg1 : i32, i32
  }
  func.func @transform_1(%arg0: i32, %arg1: i32) -> (i32, i32) {
    %c0_i32 = arith.constant 0 : i32
    %c0_i32_0 = arith.constant 0 : i32
    %c0_i32_1 = arith.constant 0 : i32
    return %c0_i32, %c0_i32_0 : i32, i32
  }
  func.func @transform_2(%arg0: i32, %arg1: i32) -> (i32, i32) {
    %c0_i32 = arith.constant 0 : i32
    %c0_i32_0 = arith.constant 0 : i32
    return %arg0, %c0_i32 : i32, i32
  }
  func.func @transform_3(%arg0: i32, %arg1: i32) -> (i32, i32) {
    %c0_i32 = arith.constant 0 : i32
    %c0_i32_0 = arith.constant 0 : i32
    %c0_i32_1 = arith.constant 0 : i32
    return %c0_i32, %c0_i32_0 : i32, i32
  }
  func.func @transform_4(%arg0: i32, %arg1: i32) -> (i32, i32) {
    %c0_i32 = arith.constant 0 : i32
    %c0_i32_0 = arith.constant 0 : i32
    return %arg0, %c0_i32 : i32, i32
  }
}

</mosaic_0001>

<llo_original>
// kernel: simple_gcn_apply.2
$region0: #{simple_gcn_apply.2}
  #allocation0 [shape = 'u32[]', space=smem, size = 0x4, offset = 0x4, fixed_abs, tag = 'smem constant byte address 0x4 - core index']
  #allocation1 [shape = 'u32[72,128]{1,0:T(1,128)}', space=vmem, size = 0x9000, scoped, tag = 'internal scratch']
  %s0 = inlined_call_operand.vmem [shape: bf16[128,8], index: 0, kind: input, shape index: {}]
  %s1 = inlined_call_operand.vmem [shape: bf16[8,128], index: 1, kind: input, shape index: {}]
  %s2 = inlined_call_operand.vmem [shape: f32[128,1], index: 2, kind: input, shape index: {}]
  %s3 = inlined_call_operand.vmem [shape: bf16[128,128], index: 3, kind: output, shape index: {}]
  %s4 = sld [smem:[#allocation0]]
  $region22: #{simple_gcn_apply.2} parent=0
    _
  %s6 = ssub.s32 1, %s4
  %s7 = scalar_select 0, %s6, %s4
  // Predicated region
  $region2: #{simple_gcn_apply.2} parent=0 // pred_check
    _
  $region3: #{simple_gcn_apply.2} parent=0 // pred_check_branch
    %9 = sbr.rel (0) target = $region5
  $region4: #{simple_gcn_apply.2} parent=0 // pred_region
    _
  $region5: #{simple_gcn_apply.2} parent=0 // pred_fallthru
    _
  // Predicated region
  $region6: #{simple_gcn_apply.2} parent=0 // pred_check
    _
  $region7: #{simple_gcn_apply.2} parent=0 // pred_check_branch
    %11 = sbr.rel (0) target = $region9
  $region8: #{simple_gcn_apply.2} parent=0 // pred_region
    _
  $region9: #{simple_gcn_apply.2} parent=0 // pred_fallthru
    _
  // Predicated region
  $region10: #{simple_gcn_apply.2} parent=0 // pred_check
    _
  $region11: #{simple_gcn_apply.2} parent=0 // pred_check_branch
    %13 = sbr.rel (0) target = $region13
  $region12: #{simple_gcn_apply.2} parent=0 // pred_region
    _
  $region13: #{simple_gcn_apply.2} parent=0 // pred_fallthru
    _
  %v15 = vld [vmem:[%s0] sm:$0xf]
  %v16 = vld [vmem:[%s0 + $0x4] sm:$0xf]
  %v17 = vld [vmem:[%s0 + $0x8] sm:$0xf]
  %v18 = vld [vmem:[%s0 + $0xc] sm:$0xf]
  %v19 = vld [vmem:[%s0 + $0x10] sm:$0xf]
  %v20 = vld [vmem:[%s0 + $0x14] sm:$0xf]
  %v21 = vld [vmem:[%s0 + $0x18] sm:$0xf]
  %v22 = vld [vmem:[%s0 + $0x1c] sm:$0xf]
  %v23 = vld [vmem:[%s0 + $0x20] sm:$0xf]
  %v24 = vld [vmem:[%s0 + $0x24] sm:$0xf]
  %v25 = vld [vmem:[%s0 + $0x28] sm:$0xf]
  %v26 = vld [vmem:[%s0 + $0x2c] sm:$0xf]
  %v27 = vld [vmem:[%s0 + $0x30] sm:$0xf]
  %v28 = vld [vmem:[%s0 + $0x34] sm:$0xf]
  %v29 = vld [vmem:[%s0 + $0x38] sm:$0xf]
  %v30 = vld [vmem:[%s0 + $0x3c] sm:$0xf]
  %v31 = vld [vmem:[%s1] sm:$0xf]
  %v48 = vunpack.c.l.b16 %v15
  %v49 = vunpack.c.l.b16 %v16
  %v50 = vunpack.c.l.b16 %v17
  %v51 = vunpack.c.l.b16 %v18
  %v52 = vunpack.c.l.b16 %v19
  %v53 = vunpack.c.l.b16 %v20
  %v54 = vunpack.c.l.b16 %v21
  %v55 = vunpack.c.l.b16 %v22
  %v56 = vunpack.c.l.b16 %v23
  %v57 = vunpack.c.l.b16 %v24
  %v58 = vunpack.c.l.b16 %v25
  %v59 = vunpack.c.l.b16 %v26
  %v60 = vunpack.c.l.b16 %v27
  %v61 = vunpack.c.l.b16 %v28
  %v62 = vunpack.c.l.b16 %v29
  %v63 = vunpack.c.l.b16 %v30
  %v64 = vpack.c.b16 %v49, %v48
  %v65 = vpack.c.b16 %v51, %v50
  %v66 = vpack.c.b16 %v53, %v52
  %v67 = vpack.c.b16 %v55, %v54
  %v68 = vpack.c.b16 %v57, %v56
  %v69 = vpack.c.b16 %v59, %v58
  %v70 = vpack.c.b16 %v61, %v60
  %v71 = vpack.c.b16 %v63, %v62
  %vm72 = vcmask 64512
  %v74 = vsel %vm72, %v64, 0
  %v77 = vsel %vm72, %v65, 0
  %v80 = vsel %vm72, %v66, 0
  %v83 = vsel %vm72, %v67, 0
  %v86 = vsel %vm72, %v68, 0
  %v89 = vsel %vm72, %v69, 0
  %v92 = vsel %vm72, %v70, 0
  %v95 = vsel %vm72, %v71, 0
  %vm97 = vcmask 1043456
  %v99 = vsel %vm97, %v31, 0
  %101 = vmatpush.bf16.msra.mxu0 0
  %102 = vmatpush.bf16.msra.mxu0 0
  %103 = vmatpush.bf16.msra.mxu0 0
  %104 = vmatpush.bf16.msra.mxu0 0
  %105 = vmatpush.bf16.msra.mxu0 0
  %106 = vmatpush.bf16.msra.mxu0 0
  %107 = vmatpush.bf16.msra.mxu0 0
  %108 = vmatpush.bf16.msra.mxu0 %v99
  %109 = vmatmul.bf16.gmra.mxu0 %v74
  %v110 = vpop.f32.mrf.mxu0
  %v111 = vadd.f32 0.0, %v110
  %v112 = vpop.f32.mrf.mxu0
  %v113 = vadd.f32 0.0, %v112
  %114 = vmatmul.bf16.gmra.mxu0 %v77
  %v115 = vpop.f32.mrf.mxu0
  %v116 = vadd.f32 0.0, %v115
  %v117 = vpop.f32.mrf.mxu0
  %v118 = vadd.f32 0.0, %v117
  %119 = vmatmul.bf16.gmra.mxu0 %v80
  %v120 = vpop.f32.mrf.mxu0
  %v121 = vadd.f32 0.0, %v120
  %v122 = vpop.f32.mrf.mxu0
  %v123 = vadd.f32 0.0, %v122
  %124 = vmatmul.bf16.gmra.mxu0 %v83
  %v125 = vpop.f32.mrf.mxu0
  %v126 = vadd.f32 0.0, %v125
  %v127 = vpop.f32.mrf.mxu0
  %v128 = vadd.f32 0.0, %v127
  %129 = vmatmul.bf16.gmra.mxu0 %v86
  %v130 = vpop.f32.mrf.mxu0
  %v131 = vadd.f32 0.0, %v130
  %v132 = vpop.f32.mrf.mxu0
  %v133 = vadd.f32 0.0, %v132
  %134 = vmatmul.bf16.gmra.mxu0 %v89
  %v135 = vpop.f32.mrf.mxu0
  %v136 = vadd.f32 0.0, %v135
  %v137 = vpop.f32.mrf.mxu0
  %v138 = vadd.f32 0.0, %v137
  %139 = vmatmul.bf16.gmra.mxu0 %v92
  %v140 = vpop.f32.mrf.mxu0
  %v141 = vadd.f32 0.0, %v140
  %v142 = vpop.f32.mrf.mxu0
  %v143 = vadd.f32 0.0, %v142
  %144 = vmatmul.bf16.gmra.mxu0 %v95
  %v145 = vpop.f32.mrf.mxu0
  %v146 = vadd.f32 0.0, %v145
  %v147 = vpop.f32.mrf.mxu0
  %v148 = vadd.f32 0.0, %v147
  %149 = vdwg.mxu0
  %v150 = vld [vmem:[%s2] sm:$0xff]
  %v151 = vld [vmem:[%s2 + $0x8] sm:$0xff]
  %v152 = vld [vmem:[%s2 + $0x10] sm:$0xff]
  %v153 = vld [vmem:[%s2 + $0x18] sm:$0xff]
  %v154 = vld [vmem:[%s2 + $0x20] sm:$0xff]
  %v155 = vld [vmem:[%s2 + $0x28] sm:$0xff]
  %v156 = vld [vmem:[%s2 + $0x30] sm:$0xff]
  %v157 = vld [vmem:[%s2 + $0x38] sm:$0xff]
  %v158 = vld [vmem:[%s2 + $0x40] sm:$0xff]
  %v159 = vld [vmem:[%s2 + $0x48] sm:$0xff]
  %v160 = vld [vmem:[%s2 + $0x50] sm:$0xff]
  %v161 = vld [vmem:[%s2 + $0x58] sm:$0xff]
  %v162 = vld [vmem:[%s2 + $0x60] sm:$0xff]
  %v163 = vld [vmem:[%s2 + $0x68] sm:$0xff]
  %v164 = vld [vmem:[%s2 + $0x70] sm:$0xff]
  %v165 = vld [vmem:[%s2 + $0x78] sm:$0xff]
  %167 = vset.pattern.permute.xlu0 0
  %168 = vperm.xlu0 %167, %v150
  %v169 = vpop.permute.xlu0 %168
  %172 = vset.pattern.permute.xlu0 0
  %173 = vperm.xlu0 %172, %v151
  %v174 = vpop.permute.xlu0 %173
  %177 = vset.pattern.permute.xlu0 0
  %178 = vperm.xlu0 %177, %v152
  %v179 = vpop.permute.xlu0 %178
  %182 = vset.pattern.permute.xlu0 0
  %183 = vperm.xlu0 %182, %v153
  %v184 = vpop.permute.xlu0 %183
  %187 = vset.pattern.permute.xlu0 0
  %188 = vperm.xlu0 %187, %v154
  %v189 = vpop.permute.xlu0 %188
  %192 = vset.pattern.permute.xlu0 0
  %193 = vperm.xlu0 %192, %v155
  %v194 = vpop.permute.xlu0 %193
  %197 = vset.pattern.permute.xlu0 0
  %198 = vperm.xlu0 %197, %v156
  %v199 = vpop.permute.xlu0 %198
  %202 = vset.pattern.permute.xlu0 0
  %203 = vperm.xlu0 %202, %v157
  %v204 = vpop.permute.xlu0 %203
  %207 = vset.pattern.permute.xlu0 0
  %208 = vperm.xlu0 %207, %v158
  %v209 = vpop.permute.xlu0 %208
  %212 = vset.pattern.permute.xlu0 0
  %213 = vperm.xlu0 %212, %v159
  %v214 = vpop.permute.xlu0 %213
  %217 = vset.pattern.permute.xlu0 0
  %218 = vperm.xlu0 %217, %v160
  %v219 = vpop.permute.xlu0 %218
  %222 = vset.pattern.permute.xlu0 0
  %223 = vperm.xlu0 %222, %v161
  %v224 = vpop.permute.xlu0 %223
  %227 = vset.pattern.permute.xlu0 0
  %228 = vperm.xlu0 %227, %v162
  %v229 = vpop.permute.xlu0 %228
  %232 = vset.pattern.permute.xlu0 0
  %233 = vperm.xlu0 %232, %v163
  %v234 = vpop.permute.xlu0 %233
  %237 = vset.pattern.permute.xlu0 0
  %238 = vperm.xlu0 %237, %v164
  %v239 = vpop.permute.xlu0 %238
  %242 = vset.pattern.permute.xlu0 0
  %243 = vperm.xlu0 %242, %v165
  %v244 = vpop.permute.xlu0 %243
  %v246 = vmul.f32 %v169, %v111
  %v247 = vmul.f32 %v174, %v113
  %v248 = vmul.f32 %v179, %v116
  %v249 = vmul.f32 %v184, %v118
  %v250 = vmul.f32 %v189, %v121
  %v251 = vmul.f32 %v194, %v123
  %v252 = vmul.f32 %v199, %v126
  %v253 = vmul.f32 %v204, %v128
  %v254 = vmul.f32 %v209, %v131
  %v255 = vmul.f32 %v214, %v133
  %v256 = vmul.f32 %v219, %v136
  %v257 = vmul.f32 %v224, %v138
  %v258 = vmul.f32 %v229, %v141
  %v259 = vmul.f32 %v234, %v143
  %v260 = vmul.f32 %v239, %v146
  %v261 = vmul.f32 %v244, %v148
  %v262 = vpack.c.bf16 %v246, %v246
  %v263 = vpack.c.bf16 %v247, %v247
  %v264 = vpack.c.bf16 %v248, %v248
  %v265 = vpack.c.bf16 %v249, %v249
  %v266 = vpack.c.bf16 %v250, %v250
  %v267 = vpack.c.bf16 %v251, %v251
  %v268 = vpack.c.bf16 %v252, %v252
  %v269 = vpack.c.bf16 %v253, %v253
  %v270 = vpack.c.bf16 %v254, %v254
  %v271 = vpack.c.bf16 %v255, %v255
  %v272 = vpack.c.bf16 %v256, %v256
  %v273 = vpack.c.bf16 %v257, %v257
  %v274 = vpack.c.bf16 %v258, %v258
  %v275 = vpack.c.bf16 %v259, %v259
  %v276 = vpack.c.bf16 %v260, %v260
  %v277 = vpack.c.bf16 %v261, %v261
  %278 = vst [vmem:[%s3] sm:$0xf] %v262
  %279 = vst [vmem:[%s3 + $0x4] sm:$0xf] %v263
  %280 = vst [vmem:[%s3 + $0x8] sm:$0xf] %v264
  %281 = vst [vmem:[%s3 + $0xc] sm:$0xf] %v265
  %282 = vst [vmem:[%s3 + $0x10] sm:$0xf] %v266
  %283 = vst [vmem:[%s3 + $0x14] sm:$0xf] %v267
  %284 = vst [vmem:[%s3 + $0x18] sm:$0xf] %v268
  %285 = vst [vmem:[%s3 + $0x1c] sm:$0xf] %v269
  %286 = vst [vmem:[%s3 + $0x20] sm:$0xf] %v270
  %287 = vst [vmem:[%s3 + $0x24] sm:$0xf] %v271
  %288 = vst [vmem:[%s3 + $0x28] sm:$0xf] %v272
  %289 = vst [vmem:[%s3 + $0x2c] sm:$0xf] %v273
  %290 = vst [vmem:[%s3 + $0x30] sm:$0xf] %v274
  %291 = vst [vmem:[%s3 + $0x34] sm:$0xf] %v275
  %292 = vst [vmem:[%s3 + $0x38] sm:$0xf] %v276
  %293 = vst [vmem:[%s3 + $0x3c] sm:$0xf] %v277
  // Predicated region
  $region14: #{simple_gcn_apply.2} parent=0 // pred_check
    _
  $region15: #{simple_gcn_apply.2} parent=0 // pred_check_branch
    %295 = sbr.rel (0) target = $region17
  $region16: #{simple_gcn_apply.2} parent=0 // pred_region
    _
  $region17: #{simple_gcn_apply.2} parent=0 // pred_fallthru
    _
  // Predicated region
  $region18: #{simple_gcn_apply.2} parent=0 // pred_check
    _
  $region19: #{simple_gcn_apply.2} parent=0 // pred_check_branch
    %297 = sbr.rel (0) target = $region21
  $region20: #{simple_gcn_apply.2} parent=0 // pred_region
    _
  $region21: #{simple_gcn_apply.2} parent=0 // pred_fallthru
    _

// kernel: simple_gcn_apply.3
$region0: #{simple_gcn_apply.3}
  #allocation0 [shape = 'u32[]', space=smem, size = 0x4, offset = 0x4, fixed_abs, tag = 'smem constant byte address 0x4 - core index']
  #allocation1 [shape = 'u32[72,128]{1,0:T(1,128)}', space=vmem, size = 0x9000, scoped, tag = 'internal scratch']
  #allocation2 [shape = 'f32[128,128]{1,0:T(8,128)}', space=vmem, size = 0x10000, scoped, tag = 'scratch operand']
  %s0 = inlined_call_operand.vmem [shape: bf16[128,128], index: 0, kind: input, shape index: {}]
  %s1 = inlined_call_operand.vmem [shape: bf16[128,128], index: 1, kind: input, shape index: {}]
  %s2 = inlined_call_operand.vmem [shape: f32[128,1], index: 2, kind: input, shape index: {}]
  %s3 = inlined_call_operand.vmem [shape: f32[1,128], index: 3, kind: input, shape index: {}]
  %s4 = inlined_call_operand.vmem [shape: f32[128,128], index: 4, kind: output, shape index: {}]
  %s5 = sld [smem:[#allocation0]]
  $region34: #{simple_gcn_apply.3} parent=0
    _
  %s7 = ssub.s32 1, %s5
  %s8 = scalar_select 0, %s7, %s5
  // Predicated region
  $region2: #{simple_gcn_apply.3} parent=0 // pred_check
    _
  $region3: #{simple_gcn_apply.3} parent=0 // pred_check_branch
    %10 = sbr.rel (0) target = $region5
  $region4: #{simple_gcn_apply.3} parent=0 // pred_region
    _
  $region5: #{simple_gcn_apply.3} parent=0 // pred_fallthru
    _
  // Predicated region
  $region6: #{simple_gcn_apply.3} parent=0 // pred_check
    _
  $region7: #{simple_gcn_apply.3} parent=0 // pred_check_branch
    %12 = sbr.rel (0) target = $region9
  $region8: #{simple_gcn_apply.3} parent=0 // pred_region
    _
  $region9: #{simple_gcn_apply.3} parent=0 // pred_fallthru
    _
  // Predicated region
  $region10: #{simple_gcn_apply.3} parent=0 // pred_check
    _
  $region11: #{simple_gcn_apply.3} parent=0 // pred_check_branch
    %14 = sbr.rel (0) target = $region13
  $region12: #{simple_gcn_apply.3} parent=0 // pred_region
    _
  $region13: #{simple_gcn_apply.3} parent=0 // pred_fallthru
    _
  // Predicated region
  $region14: #{simple_gcn_apply.3} parent=0 // pred_check
    _
  $region15: #{simple_gcn_apply.3} parent=0 // pred_check_branch
    %16 = sbr.rel (0) target = $region17
  $region16: #{simple_gcn_apply.3} parent=0 // pred_region
    _
  $region17: #{simple_gcn_apply.3} parent=0 // pred_fallthru
    _
  %p17 = scmp.eq.s32.totalorder 0, 0
  // Predicated region
  $region18: #{simple_gcn_apply.3} parent=0 // pred_check
    %p18 = pneg %p17
  $region19: #{simple_gcn_apply.3} parent=0 // pred_check_branch
    %20 = sbr.rel (%p18) target = $region21
  $region20: #{simple_gcn_apply.3} parent=0 // pred_region
    %21 = vst [vmem:[#allocation2] sm:$0xff] 0.0
    %22 = vst [vmem:[#allocation2 + $0x8] sm:$0xff] 0.0
    %23 = vst [vmem:[#allocation2 + $0x10] sm:$0xff] 0.0
    %24 = vst [vmem:[#allocation2 + $0x18] sm:$0xff] 0.0
    %25 = vst [vmem:[#allocation2 + $0x20] sm:$0xff] 0.0
    %26 = vst [vmem:[#allocation2 + $0x28] sm:$0xff] 0.0
    %27 = vst [vmem:[#allocation2 + $0x30] sm:$0xff] 0.0
    %28 = vst [vmem:[#allocation2 + $0x38] sm:$0xff] 0.0
    %29 = vst [vmem:[#allocation2 + $0x40] sm:$0xff] 0.0
    %30 = vst [vmem:[#allocation2 + $0x48] sm:$0xff] 0.0
    %31 = vst [vmem:[#allocation2 + $0x50] sm:$0xff] 0.0
    %32 = vst [vmem:[#allocation2 + $0x58] sm:$0xff] 0.0
    %33 = vst [vmem:[#allocation2 + $0x60] sm:$0xff] 0.0
    %34 = vst [vmem:[#allocation2 + $0x68] sm:$0xff] 0.0
    %35 = vst [vmem:[#allocation2 + $0x70] sm:$0xff] 0.0
    %36 = vst [vmem:[#allocation2 + $0x78] sm:$0xff] 0.0
  $region21: #{simple_gcn_apply.3} parent=0 // pred_fallthru
    _
  %s37 = smul.u32 0, 128
  %s38 = sshra.s32 %s37, 3
  %s39 = sand.u32 %s37, 7
  %s40 = smul.addr %s38, 4
  %s41 = scalar_lea.vmem %s1, %s40
  %v42 = vld [vmem:[%s41] sm:$0xf]
  %v43 = vld [vmem:[%s41 + $0x4] sm:$0xf]
  %v44 = vld [vmem:[%s41 + $0x8] sm:$0xf]
  %v45 = vld [vmem:[%s41 + $0xc] sm:$0xf]
  %v46 = vld [vmem:[%s41 + $0x10] sm:$0xf]
  %v47 = vld [vmem:[%s41 + $0x14] sm:$0xf]
  %v48 = vld [vmem:[%s41 + $0x18] sm:$0xf]
  %v49 = vld [vmem:[%s41 + $0x1c] sm:$0xf]
  %v50 = vld [vmem:[%s41 + $0x20] sm:$0xf]
  %v51 = vld [vmem:[%s41 + $0x24] sm:$0xf]
  %v52 = vld [vmem:[%s41 + $0x28] sm:$0xf]
  %v53 = vld [vmem:[%s41 + $0x2c] sm:$0xf]
  %v54 = vld [vmem:[%s41 + $0x30] sm:$0xf]
  %v55 = vld [vmem:[%s41 + $0x34] sm:$0xf]
  %v56 = vld [vmem:[%s41 + $0x38] sm:$0xf]
  %v57 = vld [vmem:[%s41 + $0x3c] sm:$0xf]
  %v58 = vld [vmem:[#allocation2] sm:$0xff]
  %v59 = vld [vmem:[#allocation2 + $0x8] sm:$0xff]
  %v60 = vld [vmem:[#allocation2 + $0x10] sm:$0xff]
  %v61 = vld [vmem:[#allocation2 + $0x18] sm:$0xff]
  %v62 = vld [vmem:[#allocation2 + $0x20] sm:$0xff]
  %v63 = vld [vmem:[#allocation2 + $0x28] sm:$0xff]
  %v64 = vld [vmem:[#allocation2 + $0x30] sm:$0xff]
  %v65 = vld [vmem:[#allocation2 + $0x38] sm:$0xff]
  %v66 = vld [vmem:[#allocation2 + $0x40] sm:$0xff]
  %v67 = vld [vmem:[#allocation2 + $0x48] sm:$0xff]
  %v68 = vld [vmem:[#allocation2 + $0x50] sm:$0xff]
  %v69 = vld [vmem:[#allocation2 + $0x58] sm:$0xff]
  %v70 = vld [vmem:[#allocation2 + $0x60] sm:$0xff]
  %v71 = vld [vmem:[#allocation2 + $0x68] sm:$0xff]
  %v72 = vld [vmem:[#allocation2 + $0x70] sm:$0xff]
  %v73 = vld [vmem:[#allocation2 + $0x78] sm:$0xff]
  %v74 = vld [vmem:[%s0] sm:$0xf]
  %v75 = vld [vmem:[%s0 + $0x4] sm:$0xf]
  %v76 = vld [vmem:[%s0 + $0x8] sm:$0xf]
  %v77 = vld [vmem:[%s0 + $0xc] sm:$0xf]
  %v78 = vld [vmem:[%s0 + $0x10] sm:$0xf]
  %v79 = vld [vmem:[%s0 + $0x14] sm:$0xf]
  %v80 = vld [vmem:[%s0 + $0x18] sm:$0xf]
  %v81 = vld [vmem:[%s0 + $0x1c] sm:$0xf]
  %v82 = vld [vmem:[%s0 + $0x20] sm:$0xf]
  %v83 = vld [vmem:[%s0 + $0x24] sm:$0xf]
  %v84 = vld [vmem:[%s0 + $0x28] sm:$0xf]
  %v85 = vld [vmem:[%s0 + $0x2c] sm:$0xf]
  %v86 = vld [vmem:[%s0 + $0x30] sm:$0xf]
  %v87 = vld [vmem:[%s0 + $0x34] sm:$0xf]
  %v88 = vld [vmem:[%s0 + $0x38] sm:$0xf]
  %v89 = vld [vmem:[%s0 + $0x3c] sm:$0xf]
  %v106 = vunpack.c.l.b16 %v74
  %v107 = vunpack.c.l.b16 %v75
  %v108 = vunpack.c.l.b16 %v76
  %v109 = vunpack.c.l.b16 %v77
  %v110 = vunpack.c.l.b16 %v78
  %v111 = vunpack.c.l.b16 %v79
  %v112 = vunpack.c.l.b16 %v80
  %v113 = vunpack.c.l.b16 %v81
  %v114 = vunpack.c.l.b16 %v82
  %v115 = vunpack.c.l.b16 %v83
  %v116 = vunpack.c.l.b16 %v84
  %v117 = vunpack.c.l.b16 %v85
  %v118 = vunpack.c.l.b16 %v86
  %v119 = vunpack.c.l.b16 %v87
  %v120 = vunpack.c.l.b16 %v88
  %v121 = vunpack.c.l.b16 %v89
  %v122 = vpack.c.b16 %v107, %v106
  %v123 = vpack.c.b16 %v109, %v108
  %v124 = vpack.c.b16 %v111, %v110
  %v125 = vpack.c.b16 %v113, %v112
  %v126 = vpack.c.b16 %v115, %v114
  %v127 = vpack.c.b16 %v117, %v116
  %v128 = vpack.c.b16 %v119, %v118
  %v129 = vpack.c.b16 %v121, %v120
  %v154 = vunpack.c.l.b16 %v42
  %v155 = vunpack.c.l.b16 %v43
  %v156 = vunpack.c.l.b16 %v44
  %v157 = vunpack.c.l.b16 %v45
  %v158 = vunpack.c.l.b16 %v46
  %v159 = vunpack.c.l.b16 %v47
  %v160 = vunpack.c.l.b16 %v48
  %v161 = vunpack.c.l.b16 %v49
  %v162 = vunpack.c.l.b16 %v50
  %v163 = vunpack.c.l.b16 %v51
  %v164 = vunpack.c.l.b16 %v52
  %v165 = vunpack.c.l.b16 %v53
  %v166 = vunpack.c.l.b16 %v54
  %v167 = vunpack.c.l.b16 %v55
  %v168 = vunpack.c.l.b16 %v56
  %v169 = vunpack.c.l.b16 %v57
  %v170 = vpack.c.b16 %v155, %v154
  %v171 = vpack.c.b16 %v157, %v156
  %v172 = vpack.c.b16 %v159, %v158
  %v173 = vpack.c.b16 %v161, %v160
  %v174 = vpack.c.b16 %v163, %v162
  %v175 = vpack.c.b16 %v165, %v164
  %v176 = vpack.c.b16 %v167, %v166
  %v177 = vpack.c.b16 %v169, %v168
  %186 = vmatpush.bf16.msra.mxu0 %v177
  %187 = vmatpush.bf16.msra.mxu0 %v176
  %188 = vmatpush.bf16.msra.mxu0 %v175
  %189 = vmatpush.bf16.msra.mxu0 %v174
  %190 = vmatpush.bf16.msra.mxu0 %v173
  %191 = vmatpush.bf16.msra.mxu0 %v172
  %192 = vmatpush.bf16.msra.mxu0 %v171
  %193 = vmatpush.bf16.msra.mxu0 %v170
  %194 = vmatmul.bf16.gmra.mxu0 %v122
  %v195 = vpop.f32.mrf.mxu0
  %v196 = vadd.f32 0.0, %v195
  %v197 = vpop.f32.mrf.mxu0
  %v198 = vadd.f32 0.0, %v197
  %199 = vmatmul.bf16.gmra.mxu0 %v123
  %v200 = vpop.f32.mrf.mxu0
  %v201 = vadd.f32 0.0, %v200
  %v202 = vpop.f32.mrf.mxu0
  %v203 = vadd.f32 0.0, %v202
  %204 = vmatmul.bf16.gmra.mxu0 %v124
  %v205 = vpop.f32.mrf.mxu0
  %v206 = vadd.f32 0.0, %v205
  %v207 = vpop.f32.mrf.mxu0
  %v208 = vadd.f32 0.0, %v207
  %209 = vmatmul.bf16.gmra.mxu0 %v125
  %v210 = vpop.f32.mrf.mxu0
  %v211 = vadd.f32 0.0, %v210
  %v212 = vpop.f32.mrf.mxu0
  %v213 = vadd.f32 0.0, %v212
  %214 = vmatmul.bf16.gmra.mxu0 %v126
  %v215 = vpop.f32.mrf.mxu0
  %v216 = vadd.f32 0.0, %v215
  %v217 = vpop.f32.mrf.mxu0
  %v218 = vadd.f32 0.0, %v217
  %219 = vmatmul.bf16.gmra.mxu0 %v127
  %v220 = vpop.f32.mrf.mxu0
  %v221 = vadd.f32 0.0, %v220
  %v222 = vpop.f32.mrf.mxu0
  %v223 = vadd.f32 0.0, %v222
  %224 = vmatmul.bf16.gmra.mxu0 %v128
  %v225 = vpop.f32.mrf.mxu0
  %v226 = vadd.f32 0.0, %v225
  %v227 = vpop.f32.mrf.mxu0
  %v228 = vadd.f32 0.0, %v227
  %229 = vmatmul.bf16.gmra.mxu0 %v129
  %v230 = vpop.f32.mrf.mxu0
  %v231 = vadd.f32 0.0, %v230
  %v232 = vpop.f32.mrf.mxu0
  %v233 = vadd.f32 0.0, %v232
  %234 = vdwg.mxu0
  %v235 = vadd.f32 %v58, %v196
  %v236 = vadd.f32 %v59, %v198
  %v237 = vadd.f32 %v60, %v201
  %v238 = vadd.f32 %v61, %v203
  %v239 = vadd.f32 %v62, %v206
  %v240 = vadd.f32 %v63, %v208
  %v241 = vadd.f32 %v64, %v211
  %v242 = vadd.f32 %v65, %v213
  %v243 = vadd.f32 %v66, %v216
  %v244 = vadd.f32 %v67, %v218
  %v245 = vadd.f32 %v68, %v221
  %v246 = vadd.f32 %v69, %v223
  %v247 = vadd.f32 %v70, %v226
  %v248 = vadd.f32 %v71, %v228
  %v249 = vadd.f32 %v72, %v231
  %v250 = vadd.f32 %v73, %v233
  %251 = vst [vmem:[#allocation2] sm:$0xff] %v235
  %252 = vst [vmem:[#allocation2 + $0x8] sm:$0xff] %v236
  %253 = vst [vmem:[#allocation2 + $0x10] sm:$0xff] %v237
  %254 = vst [vmem:[#allocation2 + $0x18] sm:$0xff] %v238
  %255 = vst [vmem:[#allocation2 + $0x20] sm:$0xff] %v239
  %256 = vst [vmem:[#allocation2 + $0x28] sm:$0xff] %v240
  %257 = vst [vmem:[#allocation2 + $0x30] sm:$0xff] %v241
  %258 = vst [vmem:[#allocation2 + $0x38] sm:$0xff] %v242
  %259 = vst [vmem:[#allocation2 + $0x40] sm:$0xff] %v243
  %260 = vst [vmem:[#allocation2 + $0x48] sm:$0xff] %v244
  %261 = vst [vmem:[#allocation2 + $0x50] sm:$0xff] %v245
  %262 = vst [vmem:[#allocation2 + $0x58] sm:$0xff] %v246
  %263 = vst [vmem:[#allocation2 + $0x60] sm:$0xff] %v247
  %264 = vst [vmem:[#allocation2 + $0x68] sm:$0xff] %v248
  %265 = vst [vmem:[#allocation2 + $0x70] sm:$0xff] %v249
  %266 = vst [vmem:[#allocation2 + $0x78] sm:$0xff] %v250
  // Predicated region
  $region22: #{simple_gcn_apply.3} parent=0 // pred_check
    %p267 = pneg %p17
  $region23: #{simple_gcn_apply.3} parent=0 // pred_check_branch
    %269 = sbr.rel (%p267) target = $region25
  $region24: #{simple_gcn_apply.3} parent=0 // pred_region
    %v270 = vld [vmem:[%s2] sm:$0xff]
    %v271 = vld [vmem:[%s2 + $0x8] sm:$0xff]
    %v272 = vld [vmem:[%s2 + $0x10] sm:$0xff]
    %v273 = vld [vmem:[%s2 + $0x18] sm:$0xff]
    %v274 = vld [vmem:[%s2 + $0x20] sm:$0xff]
    %v275 = vld [vmem:[%s2 + $0x28] sm:$0xff]
    %v276 = vld [vmem:[%s2 + $0x30] sm:$0xff]
    %v277 = vld [vmem:[%s2 + $0x38] sm:$0xff]
    %v278 = vld [vmem:[%s2 + $0x40] sm:$0xff]
    %v279 = vld [vmem:[%s2 + $0x48] sm:$0xff]
    %v280 = vld [vmem:[%s2 + $0x50] sm:$0xff]
    %v281 = vld [vmem:[%s2 + $0x58] sm:$0xff]
    %v282 = vld [vmem:[%s2 + $0x60] sm:$0xff]
    %v283 = vld [vmem:[%s2 + $0x68] sm:$0xff]
    %v284 = vld [vmem:[%s2 + $0x70] sm:$0xff]
    %v285 = vld [vmem:[%s2 + $0x78] sm:$0xff]
    %v286 = vld [vmem:[#allocation2] sm:$0xff]
    %v287 = vld [vmem:[#allocation2 + $0x8] sm:$0xff]
    %v288 = vld [vmem:[#allocation2 + $0x10] sm:$0xff]
    %v289 = vld [vmem:[#allocation2 + $0x18] sm:$0xff]
    %v290 = vld [vmem:[#allocation2 + $0x20] sm:$0xff]
    %v291 = vld [vmem:[#allocation2 + $0x28] sm:$0xff]
    %v292 = vld [vmem:[#allocation2 + $0x30] sm:$0xff]
    %v293 = vld [vmem:[#allocation2 + $0x38] sm:$0xff]
    %v294 = vld [vmem:[#allocation2 + $0x40] sm:$0xff]
    %v295 = vld [vmem:[#allocation2 + $0x48] sm:$0xff]
    %v296 = vld [vmem:[#allocation2 + $0x50] sm:$0xff]
    %v297 = vld [vmem:[#allocation2 + $0x58] sm:$0xff]
    %v298 = vld [vmem:[#allocation2 + $0x60] sm:$0xff]
    %v299 = vld [vmem:[#allocation2 + $0x68] sm:$0xff]
    %v300 = vld [vmem:[#allocation2 + $0x70] sm:$0xff]
    %v301 = vld [vmem:[#allocation2 + $0x78] sm:$0xff]
    %303 = vset.pattern.permute.xlu0 0
    %304 = vperm.xlu0 %303, %v270
    %v305 = vpop.permute.xlu0 %304
    %308 = vset.pattern.permute.xlu0 0
    %309 = vperm.xlu0 %308, %v271
    %v310 = vpop.permute.xlu0 %309
    %313 = vset.pattern.permute.xlu0 0
    %314 = vperm.xlu0 %313, %v272
    %v315 = vpop.permute.xlu0 %314
    %318 = vset.pattern.permute.xlu0 0
    %319 = vperm.xlu0 %318, %v273
    %v320 = vpop.permute.xlu0 %319
    %323 = vset.pattern.permute.xlu0 0
    %324 = vperm.xlu0 %323, %v274
    %v325 = vpop.permute.xlu0 %324
    %328 = vset.pattern.permute.xlu0 0
    %329 = vperm.xlu0 %328, %v275
    %v330 = vpop.permute.xlu0 %329
    %333 = vset.pattern.permute.xlu0 0
    %334 = vperm.xlu0 %333, %v276
    %v335 = vpop.permute.xlu0 %334
    %338 = vset.pattern.permute.xlu0 0
    %339 = vperm.xlu0 %338, %v277
    %v340 = vpop.permute.xlu0 %339
    %343 = vset.pattern.permute.xlu0 0
    %344 = vperm.xlu0 %343, %v278
    %v345 = vpop.permute.xlu0 %344
    %348 = vset.pattern.permute.xlu0 0
    %349 = vperm.xlu0 %348, %v279
    %v350 = vpop.permute.xlu0 %349
    %353 = vset.pattern.permute.xlu0 0
    %354 = vperm.xlu0 %353, %v280
    %v355 = vpop.permute.xlu0 %354
    %358 = vset.pattern.permute.xlu0 0
    %359 = vperm.xlu0 %358, %v281
    %v360 = vpop.permute.xlu0 %359
    %363 = vset.pattern.permute.xlu0 0
    %364 = vperm.xlu0 %363, %v282
    %v365 = vpop.permute.xlu0 %364
    %368 = vset.pattern.permute.xlu0 0
    %369 = vperm.xlu0 %368, %v283
    %v370 = vpop.permute.xlu0 %369
    %373 = vset.pattern.permute.xlu0 0
    %374 = vperm.xlu0 %373, %v284
    %v375 = vpop.permute.xlu0 %374
    %378 = vset.pattern.permute.xlu0 0
    %379 = vperm.xlu0 %378, %v285
    %v380 = vpop.permute.xlu0 %379
    %v382 = vmul.f32 %v305, %v286
    %v383 = vmul.f32 %v310, %v287
    %v384 = vmul.f32 %v315, %v288
    %v385 = vmul.f32 %v320, %v289
    %v386 = vmul.f32 %v325, %v290
    %v387 = vmul.f32 %v330, %v291
    %v388 = vmul.f32 %v335, %v292
    %v389 = vmul.f32 %v340, %v293
    %v390 = vmul.f32 %v345, %v294
    %v391 = vmul.f32 %v350, %v295
    %v392 = vmul.f32 %v355, %v296
    %v393 = vmul.f32 %v360, %v297
    %v394 = vmul.f32 %v365, %v298
    %v395 = vmul.f32 %v370, %v299
    %v396 = vmul.f32 %v375, %v300
    %v397 = vmul.f32 %v380, %v301
    %v398 = vld [vmem:[%s3] sm:$0x1]
    %v400 = vperm.slane %v398, 0
    %v402 = vadd.f32 %v382, %v400
    %v403 = vadd.f32 %v383, %v400
    %v404 = vadd.f32 %v384, %v400
    %v405 = vadd.f32 %v385, %v400
    %v406 = vadd.f32 %v386, %v400
    %v407 = vadd.f32 %v387, %v400
    %v408 = vadd.f32 %v388, %v400
    %v409 = vadd.f32 %v389, %v400
    %v410 = vadd.f32 %v390, %v400
    %v411 = vadd.f32 %v391, %v400
    %v412 = vadd.f32 %v392, %v400
    %v413 = vadd.f32 %v393, %v400
    %v414 = vadd.f32 %v394, %v400
    %v415 = vadd.f32 %v395, %v400
    %v416 = vadd.f32 %v396, %v400
    %v417 = vadd.f32 %v397, %v400
    %v418 = vmax.f32 %v402, 0.0
    %v419 = vmax.f32 %v403, 0.0
    %v420 = vmax.f32 %v404, 0.0
    %v421 = vmax.f32 %v405, 0.0
    %v422 = vmax.f32 %v406, 0.0
    %v423 = vmax.f32 %v407, 0.0
    %v424 = vmax.f32 %v408, 0.0
    %v425 = vmax.f32 %v409, 0.0
    %v426 = vmax.f32 %v410, 0.0
    %v427 = vmax.f32 %v411, 0.0
    %v428 = vmax.f32 %v412, 0.0
    %v429 = vmax.f32 %v413, 0.0
    %v430 = vmax.f32 %v414, 0.0
    %v431 = vmax.f32 %v415, 0.0
    %v432 = vmax.f32 %v416, 0.0
    %v433 = vmax.f32 %v417, 0.0
    %434 = vst [vmem:[%s4] sm:$0xff] %v418
    %435 = vst [vmem:[%s4 + $0x8] sm:$0xff] %v419
    %436 = vst [vmem:[%s4 + $0x10] sm:$0xff] %v420
    %437 = vst [vmem:[%s4 + $0x18] sm:$0xff] %v421
    %438 = vst [vmem:[%s4 + $0x20] sm:$0xff] %v422
    %439 = vst [vmem:[%s4 + $0x28] sm:$0xff] %v423
    %440 = vst [vmem:[%s4 + $0x30] sm:$0xff] %v424
    %441 = vst [vmem:[%s4 + $0x38] sm:$0xff] %v425
    %442 = vst [vmem:[%s4 + $0x40] sm:$0xff] %v426
    %443 = vst [vmem:[%s4 + $0x48] sm:$0xff] %v427
    %444 = vst [vmem:[%s4 + $0x50] sm:$0xff] %v428
    %445 = vst [vmem:[%s4 + $0x58] sm:$0xff] %v429
    %446 = vst [vmem:[%s4 + $0x60] sm:$0xff] %v430
    %447 = vst [vmem:[%s4 + $0x68] sm:$0xff] %v431
    %448 = vst [vmem:[%s4 + $0x70] sm:$0xff] %v432
    %449 = vst [vmem:[%s4 + $0x78] sm:$0xff] %v433
  $region25: #{simple_gcn_apply.3} parent=0 // pred_fallthru
    _
  // Predicated region
  $region26: #{simple_gcn_apply.3} parent=0 // pred_check
    _
  $region27: #{simple_gcn_apply.3} parent=0 // pred_check_branch
    %451 = sbr.rel (0) target = $region29
  $region28: #{simple_gcn_apply.3} parent=0 // pred_region
    _
  $region29: #{simple_gcn_apply.3} parent=0 // pred_fallthru
    _
  // Predicated region
  $region30: #{simple_gcn_apply.3} parent=0 // pred_check
    _
  $region31: #{simple_gcn_apply.3} parent=0 // pred_check_branch
    %453 = sbr.rel (0) target = $region33
  $region32: #{simple_gcn_apply.3} parent=0 // pred_region
    _
  $region33: #{simple_gcn_apply.3} parent=0 // pred_fallthru
    _

</llo_original>
